<compile_context>
chip_gen: v6e
topology: v6e:2x2x1
jax: 0.10.0
libtpu: 0.0.40
codegen_flags: <defaults>
</compile_context>

<pallas_src>
import jax
import jax.numpy as jnp
from jax.experimental import pallas as pl
from jax.experimental.pallas import tpu as pltpu

_IN = 129
_H1, _H2, _OUT = 100, 84, 64
_LANES = 128                       # lane-padded hidden widths


def _round_up(n, m):
    return (n + m - 1) // m * m


def _pad2(a, rows, cols):
    r, c = a.shape
    return jnp.pad(a, ((0, rows - r), (0, cols - c)))


def _make_kernel(n_chunks, chunk):
    def kernel(xm_ref, xl_ref, w_ref, w1l_ref, b_ref, o_ref):
        # Resident weights (bf16) / biases (f32); constant index_map -> DMA'd once.
        w1 = w_ref[0]                      # (128,128) bf16
        w2 = w_ref[1]                      # (128,128) bf16
        w3 = w_ref[2]                      # (128,128) bf16 (cols 64..127 zero)
        b1 = b_ref[0:1, :]                 # (1,128) f32
        b2 = b_ref[1:2, :]
        b3 = b_ref[2:3, :]
        w1_last = w1l_ref[...]             # (1,128) f32, row for feature #129

        # Static sub-tiles of the batch: independent chains let the scheduler
        # co-issue the next chunk's MXU pushes with this chunk's VPU relu/bias.
        for c in range(n_chunks):
            r0 = c * chunk                              # static, 8-aligned
            xm = xm_ref[pl.ds(r0, chunk), :]            # (chunk,128) bf16
            xl = xl_ref[pl.ds(r0, chunk), :]            # (chunk,1)   f32

            # fc1: K=128 bf16 MXU contraction + rank-1 f32 VPU update.
            h1 = jnp.dot(xm, w1, preferred_element_type=jnp.float32)
            h1 = jnp.maximum(h1 + xl * w1_last + b1, 0.0)

            # fc2 + relu (K=128-aligned thanks to zero padding).
            h2 = jnp.dot(h1.astype(jnp.bfloat16), w2,
                         preferred_element_type=jnp.float32)
            h2 = jnp.maximum(h2 + b2, 0.0)

            # fc3 -> store only the 64 useful lanes (lane-dense 64-wide output).
            h3 = jnp.dot(h2.astype(jnp.bfloat16), w3,
                         preferred_element_type=jnp.float32) + b3
            o_ref[pl.ds(r0, chunk), :] = h3[:, :_OUT]
    return kernel


def encoder_forward(x, params, *, tile_b=1024):
    """x: (B, 129) float.  params: pre-transposed (in,out) weights, (1,out) biases."""
    B, D_in = x.shape
    assert D_in == _IN

    # ---- batch tiling -------------------------------------------------------
    B8 = _round_up(B, 8)
    tile = max(8, min(_round_up(tile_b, 8), B8))
    # v7x megacore: guarantee >= 2 grid steps when the batch allows it, so both
    # TensorCores get work under dimension_semantics=("parallel",).
    if B8 > 8 and _round_up(B, tile) // tile < 2:
        tile = max(8, _round_up((B8 + 1) // 2, 8))
    if tile >= 512:
        tile = (tile // 256) * 256          # clean MXU M-runs / chunking
    B_pad = _round_up(B, tile)

    # In-kernel sub-tiling (chunks of >=128 rows, multiple of 8).
    n_chunks = 1
    for c in (4, 2):
        if tile % c == 0 and (tile // c) % 8 == 0 and tile // c >= 128:
            n_chunks = c
            break
    chunk = tile // n_chunks

    # VMEM arithmetic (double-buffered), tile=2048 worst case:
    #   x_main bf16 2*512KB + x_last (lane-padded) 2*1MB + out f32 2*1MB
    #   + weights ~0.13MB  ~= 5 MiB  << 32 MiB scoped limit / 64 MiB v7x phys.

    # ---- input shaping ------------------------------------------------------
    if B_pad != B:
        x = jnp.pad(x, ((0, B_pad - B), (0, 0)))
    # Split the 129th feature off; the bf16 cast fuses with the slice (one pass).
    x_main = x[:, :_LANES].astype(jnp.bfloat16)       # (B_pad,128) bf16
    x_last = x[:, _LANES:].astype(jnp.float32)        # (B_pad,1)   f32

    # ---- weight shaping (one-time; resident in VMEM) ------------------------
    w1, b1 = params["w1"], params["b1"]     # (129,100), (1,100)
    w2, b2 = params["w2"], params["b2"]     # (100, 84), (1, 84)
    w3, b3 = params["w3"], params["b3"]     # ( 84, 64), (1, 64)
    w_all = jnp.stack([
        _pad2(w1[:_LANES, :], _LANES, _LANES),         # fc1 main rows
        _pad2(w2, _LANES, _LANES),
        _pad2(w3, _LANES, _LANES),
    ]).astype(jnp.bfloat16)                            # (3,128,128) bf16
    w1_last = _pad2(w1[_LANES:_LANES + 1, :], 1, _LANES).astype(jnp.float32)
    b_all = jnp.concatenate([
        _pad2(b1, 1, _LANES), _pad2(b2, 1, _LANES), _pad2(b3, 1, _LANES),
    ], axis=0).astype(jnp.float32)                     # (3,128) f32

    grid = (B_pad // tile,)
    resident2 = lambda i: (0, 0)
    resident3 = lambda i: (0, 0, 0)

    out = pl.pallas_call(
        _make_kernel(n_chunks, chunk),
        out_shape=jax.ShapeDtypeStruct((B_pad, _OUT), jnp.float32),
        grid_spec=pl.GridSpec(
            grid=grid,
            in_specs=[
                pl.BlockSpec((tile, _LANES), lambda i: (i, 0)),   # x_main (streams)
                pl.BlockSpec((tile, 1), lambda i: (i, 0)),        # x_last (streams)
                pl.BlockSpec((3, _LANES, _LANES), resident3),     # fused weights
                pl.BlockSpec((1, _LANES), resident2),             # w1 row #129
                pl.BlockSpec((3, _LANES), resident2),             # fused biases
            ],
            out_specs=pl.BlockSpec((tile, _OUT), lambda i: (i, 0)),
        ),
        compiler_params=pltpu.CompilerParams(
            dimension_semantics=("parallel",),        # megacore-shard the batch
            vmem_limit_bytes=32 * 1024 * 1024,
        ),
    )(x_main, x_last, w_all, w1_last, b_all)

    return out if B_pad == B else out[:B]


def init_params(key):
    """Deterministic init mimicking nn.Linear default (uniform(+-1/sqrt(fan_in))).
    Weights stored transposed: (in_features, out_features)."""
    dims = [(_IN, _H1), (_H1, _H2), (_H2, _OUT)]
    params = {}
    for idx, (fan_in, fan_out) in enumerate(dims, start=1):
        key, kw, kb = jax.random.split(key, 3)
        bound = 1.0 / jnp.sqrt(jnp.float32(fan_in))
        params[f"w{idx}"] = jax.random.uniform(
            kw, (fan_in, fan_out), jnp.float32, -bound, bound)
        params[f"b{idx}"] = jax.random.uniform(
            kb, (1, fan_out), jnp.float32, -bound, bound)
    return params


def encoder_ref(x, params):
    h1 = jnp.maximum(x @ params["w1"] + params["b1"], 0.0)
    h2 = jnp.maximum(h1 @ params["w2"] + params["b2"], 0.0)
    return h2 @ params["w3"] + params["b3"]


# TODO(synk): nn.Dropout(0.5) is defined but never applied in the module's
# forward; intentionally omitted (inference-only forward).

if __name__ == "__main__":
    key = jax.random.PRNGKey(0)
    key, kx = jax.random.split(key)

    B = 16                                   # small demo batch (tile auto-clamps to 8, grid=2)
    x = jax.random.normal(kx, (B, _IN), jnp.float32)
    params = init_params(key)

    out = encoder_forward(x, params)
    out = jax.block_until_ready(out)

    ref = encoder_ref(x, params)
    assert out.shape == (B, _OUT)
    # bf16 MXU operands (incl. bf16 x_main) -> loosened tolerance vs f32 reference.
    assert jnp.allclose(out, ref, atol=3e-2, rtol=3e-2), "mismatch vs JAX reference"

    print("KERNEL_OK")
</pallas_src>

<mosaic_0001>
module attributes {stable_mosaic.version = 11 : i64} {
  func.func @kernel(%arg0: i32, %arg1: memref<8x128xbf16, #tpu.memory_space<vmem>>, %arg2: memref<8x1xf32, #tpu.memory_space<vmem>>, %arg3: memref<3x128x128xbf16, #tpu.memory_space<vmem>>, %arg4: memref<1x128xf32, #tpu.memory_space<vmem>>, %arg5: memref<3x128xf32, #tpu.memory_space<vmem>>, %arg6: memref<8x64xf32, #tpu.memory_space<vmem>>) attributes {dimension_semantics = [#tpu.dimension_semantics<parallel>], iteration_bounds = array<i64: 2>, scalar_prefetch = 0 : i64, scratch_operands = 0 : i64, tpu.core_type = #tpu.core_type<tc>, window_params = [{transform_indices = @transform_0, window_bounds = array<i64: 8, 128>}, {transform_indices = @transform_1, window_bounds = array<i64: 8, 1>}, {pipeline_mode = #tpu.pipeline_mode<synchronous>, transform_indices = @transform_2, window_bounds = array<i64: 3, 128, 128>}, {pipeline_mode = #tpu.pipeline_mode<synchronous>, transform_indices = @transform_3, window_bounds = array<i64: 1, 128>}, {pipeline_mode = #tpu.pipeline_mode<synchronous>, transform_indices = @transform_4, window_bounds = array<i64: 3, 128>}, {transform_indices = @transform_5, window_bounds = array<i64: 8, 64>}]} {
    %c0 = arith.constant 0 : index
    %c0_0 = arith.constant 0 : index
    %c0_1 = arith.constant 0 : index
    %0 = vector.load %arg3[%c0, %c0_0, %c0_1] : memref<3x128x128xbf16, #tpu.memory_space<vmem>>, vector<1x128x128xbf16>
    %1 = vector.shape_cast %0 : vector<1x128x128xbf16> to vector<128x128xbf16>
    %c1 = arith.constant 1 : index
    %c0_2 = arith.constant 0 : index
    %c0_3 = arith.constant 0 : index
    %2 = vector.load %arg3[%c1, %c0_2, %c0_3] : memref<3x128x128xbf16, #tpu.memory_space<vmem>>, vector<1x128x128xbf16>
    %3 = vector.shape_cast %2 : vector<1x128x128xbf16> to vector<128x128xbf16>
    %c2 = arith.constant 2 : index
    %c0_4 = arith.constant 0 : index
    %c0_5 = arith.constant 0 : index
    %4 = vector.load %arg3[%c2, %c0_4, %c0_5] : memref<3x128x128xbf16, #tpu.memory_space<vmem>>, vector<1x128x128xbf16>
    %5 = vector.shape_cast %4 : vector<1x128x128xbf16> to vector<128x128xbf16>
    %c0_6 = arith.constant 0 : index
    %c0_7 = arith.constant 0 : index
    %6 = vector.load %arg5[%c0_6, %c0_7] : memref<3x128xf32, #tpu.memory_space<vmem>>, vector<1x128xf32>
    %c1_8 = arith.constant 1 : index
    %c0_9 = arith.constant 0 : index
    %7 = vector.load %arg5[%c1_8, %c0_9] : memref<3x128xf32, #tpu.memory_space<vmem>>, vector<1x128xf32>
    %c2_10 = arith.constant 2 : index
    %c0_11 = arith.constant 0 : index
    %8 = vector.load %arg5[%c2_10, %c0_11] : memref<3x128xf32, #tpu.memory_space<vmem>>, vector<1x128xf32>
    %c0_12 = arith.constant 0 : index
    %c0_13 = arith.constant 0 : index
    %9 = vector.load %arg4[%c0_12, %c0_13] : memref<1x128xf32, #tpu.memory_space<vmem>>, vector<1x128xf32>
    %c0_14 = arith.constant 0 : index
    %c0_15 = arith.constant 0 : index
    %10 = vector.load %arg1[%c0_14, %c0_15] : memref<8x128xbf16, #tpu.memory_space<vmem>>, vector<8x128xbf16>
    %c0_16 = arith.constant 0 : index
    %c0_17 = arith.constant 0 : index
    %11 = vector.load %arg2[%c0_16, %c0_17] : memref<8x1xf32, #tpu.memory_space<vmem>>, vector<8x1xf32>
    %cst = arith.constant dense<0.000000e+00> : vector<8x128xf32>
    %12 = tpu.matmul %10, %1, %cst {dimension_numbers = #tpu.dot_dimension_numbers<[1], [0], [0], [1], [0, 0, 1, 1], [], []>} : vector<8x128xbf16>, vector<128x128xbf16>, vector<8x128xf32> -> vector<8x128xf32>
    %13 = vector.broadcast %11 : vector<8x1xf32> to vector<8x128xf32>
    %14 = vector.broadcast %9 : vector<1x128xf32> to vector<8x128xf32>
    %15 = arith.mulf %13, %14 : vector<8x128xf32>
    %16 = arith.addf %12, %15 : vector<8x128xf32>
    %17 = vector.broadcast %6 : vector<1x128xf32> to vector<8x128xf32>
    %18 = arith.addf %16, %17 : vector<8x128xf32>
    %cst_18 = arith.constant 0.000000e+00 : f32
    %19 = vector.broadcast %cst_18 : f32 to vector<8x128xf32>
    %20 = arith.maximumf %18, %19 : vector<8x128xf32>
    %21 = arith.truncf %20 : vector<8x128xf32> to vector<8x128xbf16>
    %cst_19 = arith.constant dense<0.000000e+00> : vector<8x128xf32>
    %22 = tpu.matmul %21, %3, %cst_19 {dimension_numbers = #tpu.dot_dimension_numbers<[1], [0], [0], [1], [0, 0, 1, 1], [], []>} : vector<8x128xbf16>, vector<128x128xbf16>, vector<8x128xf32> -> vector<8x128xf32>
    %23 = vector.broadcast %7 : vector<1x128xf32> to vector<8x128xf32>
    %24 = arith.addf %22, %23 : vector<8x128xf32>
    %cst_20 = arith.constant 0.000000e+00 : f32
    %25 = vector.broadcast %cst_20 : f32 to vector<8x128xf32>
    %26 = arith.maximumf %24, %25 : vector<8x128xf32>
    %27 = arith.truncf %26 : vector<8x128xf32> to vector<8x128xbf16>
    %cst_21 = arith.constant dense<0.000000e+00> : vector<8x128xf32>
    %28 = tpu.matmul %27, %5, %cst_21 {dimension_numbers = #tpu.dot_dimension_numbers<[1], [0], [0], [1], [0, 0, 1, 1], [], []>} : vector<8x128xbf16>, vector<128x128xbf16>, vector<8x128xf32> -> vector<8x128xf32>
    %29 = vector.broadcast %8 : vector<1x128xf32> to vector<8x128xf32>
    %30 = arith.addf %28, %29 : vector<8x128xf32>
    %31 = vector.extract_strided_slice %30 {offsets = [0, 0], sizes = [8, 64], strides = [1, 1]} : vector<8x128xf32> to vector<8x64xf32>
    %c0_22 = arith.constant 0 : index
    %c0_23 = arith.constant 0 : index
    %32 = vector.load %arg6[%c0_22, %c0_23] : memref<8x64xf32, #tpu.memory_space<vmem>>, vector<8x64xf32>
    tpu.vector_store %arg6[%c0_22, %c0_23], %31 {strides = array<i32>} : memref<8x64xf32, #tpu.memory_space<vmem>>, vector<8x64xf32>,
    return
  }
  func.func @transform_0(%arg0: i32) -> (i32, i32) {
    %c0_i32 = arith.constant 0 : i32
    %c0_i32_0 = arith.constant 0 : i32
    return %arg0, %c0_i32 : i32, i32
  }
  func.func @transform_1(%arg0: i32) -> (i32, i32) {
    %c0_i32 = arith.constant 0 : i32
    %c0_i32_0 = arith.constant 0 : i32
    return %arg0, %c0_i32 : i32, i32
  }
  func.func @transform_2(%arg0: i32) -> (i32, i32, i32) {
    %c0_i32 = arith.constant 0 : i32
    %c0_i32_0 = arith.constant 0 : i32
    %c0_i32_1 = arith.constant 0 : i32
    %c0_i32_2 = arith.constant 0 : i32
    return %c0_i32, %c0_i32_0, %c0_i32_1 : i32, i32, i32
  }
  func.func @transform_3(%arg0: i32) -> (i32, i32) {
    %c0_i32 = arith.constant 0 : i32
    %c0_i32_0 = arith.constant 0 : i32
    %c0_i32_1 = arith.constant 0 : i32
    return %c0_i32, %c0_i32_0 : i32, i32
  }
  func.func @transform_4(%arg0: i32) -> (i32, i32) {
    %c0_i32 = arith.constant 0 : i32
    %c0_i32_0 = arith.constant 0 : i32
    %c0_i32_1 = arith.constant 0 : i32
    return %c0_i32, %c0_i32_0 : i32, i32
  }
  func.func @transform_5(%arg0: i32) -> (i32, i32) {
    %c0_i32 = arith.constant 0 : i32
    %c0_i32_0 = arith.constant 0 : i32
    return %arg0, %c0_i32 : i32, i32
  }
}

</mosaic_0001>

<llo_original>
// kernel: tpu_custom_call.1
$region0: #{tpu_custom_call.1}
  #allocation0 [shape = 'u32[]', space=smem, size = 0x4, offset = 0x4, fixed_abs, tag = 'smem constant byte address 0x4 - core index']
  #allocation1 [shape = 'u32[144,128]{1,0:T(1,128)}', space=vmem, size = 0x12000, scoped, tag = 'internal scratch']
  %s0 = inlined_call_operand.vmem [shape: bf16[16,128], index: 0, kind: input, shape index: {}]
  %s1 = inlined_call_operand.vmem [shape: f32[16,1], index: 1, kind: input, shape index: {}]
  %s2 = inlined_call_operand.hbm [shape: bf16[3,128,128], index: 2, kind: input, shape index: {}]
  %s3 = inlined_call_operand.vmem [shape: f32[1,128], index: 3, kind: input, shape index: {}]
  %s4 = inlined_call_operand.vmem [shape: f32[3,128], index: 4, kind: input, shape index: {}]
  %s5 = inlined_call_operand.hbm [shape: f32[16,64], index: 5, kind: output, shape index: {}]
  %s6 = sld [smem:[#allocation0]]
  $region57: #{tpu_custom_call.1} parent=0
    _
  %s8 = ssub.s32 1, %s6
  %s9 = scalar_select 0, %s8, %s6
  $region1: #{tpu_custom_call.1} parent=0
    #allocation2 [shape = 'u8[98304]{0}', space=vmem, size = 0x18000, scoped, tag = 'input window, operand 2, single buffered']
    #allocation3 [shape = 's32[2]{0}', space=sflag, size = 0x8, scoped, tag = 'scoped memory for tpu_custom_call.1']
    #allocation4 [shape = 's32[2]{0}', space=sflag, size = 0x8, scoped, tag = 'scoped memory for tpu_custom_call.1']
    #allocation5 [shape = 'u8[8192]{0}', space=vmem, size = 0x2000, scoped, tag = 'output window, operand 0']
    %10 = vsyncpa [#allocation3], 0
    %11 = vsyncpa [#allocation4], 0
    %s12 = scalar_lea.sflag [#allocation4], 1
    %13 = vsyncpa %s12, 0
    loop: start=0, step=1, limit=4
    $region2: #{tpu_custom_call.1} parent=1 // loop_pre_header
      _
    $region3: #{tpu_custom_call.1} parent=1 // loop_header
      %s15 = sphi 0, %s19
      %p16 = scmp.ge.s32.totalorder %s15, 4
      %s25 = sphi 0, %s27
      %s28 = sphi 0, %s25
      %s29 = sphi 0, %s28
      %s45 = sphi 0, %s29
      %s51 = sphi 0, %s53
      %s54 = sphi 0, %s51
      %s55 = sphi 0, %s54
      %s71 = sphi 0, %s55
      %s75 = sphi 0, %s75
      %s77 = sphi 0, %s75
      %s78 = sphi 0, %s77
      %s92 = sphi 0, %s78
      %s96 = sphi 0, %s96
      %s98 = sphi 0, %s96
      %s99 = sphi 0, %s98
      %s113 = sphi 0, %s99
      %s117 = sphi 0, %s117
      %s119 = sphi 0, %s117
      %s120 = sphi 0, %s119
      %s134 = sphi 0, %s120
      %s140 = sphi 0, %s142
      %s143 = sphi 0, %s140
      %s144 = sphi 0, %s143
      %s160 = sphi 0, %s144
    $region4: #{tpu_custom_call.1} parent=1 // loop_header_branch
      %18 = sbr.rel (%p16) target = $region8
    $region5: #{tpu_custom_call.1} parent=1 // loop_body
      %s20 = ssub.s32 %s15, 1
      %s21 = ssub.s32 %s15, 2
      %s22 = sadd.s32 %s15, 1
      %s23 = ssub.s32 %s15, %s22
      %p24 = scmp.eq.s32.totalorder %s23, 0
      %s26 = sadd.s32 %s25, 1
      %s27 = scalar_select %p24, %s25, %s26
      %p30 = pneg %p24
      %p31 = scmp.eq.s32.totalorder %s15, 1
      %p32 = por %p30, %p31
      %p33 = scmp.ne.s32.totalorder %s25, %s28
      %p34 = scmp.eq.s32.totalorder %s15, 0
      %p35 = por %p33, %p34
      %p36 = scmp.ne.s32.totalorder %s25, %s28
      %p37 = scmp.eq.s32.totalorder %s20, 1
      %p38 = por %p36, %p37
      %p39 = scmp.ne.s32.totalorder %s28, %s29
      %p40 = scmp.eq.s32.totalorder %s20, 0
      %p41 = por %p39, %p40
      %p42 = scmp.ne.s32.totalorder %s28, %s29
      %p43 = scmp.eq.s32.totalorder %s21, 1
      %p44 = por %p42, %p43
      %p46 = scmp.ne.s32.totalorder %s29, %s45
      %p47 = scmp.eq.s32.totalorder %s21, 0
      %p48 = por %p46, %p47
      %s49 = ssub.s32 %s15, %s22
      %p50 = scmp.eq.s32.totalorder %s49, 0
      %s52 = sadd.s32 %s51, 1
      %s53 = scalar_select %p50, %s51, %s52
      %p56 = pneg %p50
      %p57 = scmp.eq.s32.totalorder %s15, 1
      %p58 = por %p56, %p57
      %p59 = scmp.ne.s32.totalorder %s51, %s54
      %p60 = scmp.eq.s32.totalorder %s15, 0
      %p61 = por %p59, %p60
      %p62 = scmp.ne.s32.totalorder %s51, %s54
      %p63 = scmp.eq.s32.totalorder %s20, 1
      %p64 = por %p62, %p63
      %p65 = scmp.ne.s32.totalorder %s54, %s55
      %p66 = scmp.eq.s32.totalorder %s20, 0
      %p67 = por %p65, %p66
      %p68 = scmp.ne.s32.totalorder %s54, %s55
      %p69 = scmp.eq.s32.totalorder %s21, 1
      %p70 = por %p68, %p69
      %p72 = scmp.ne.s32.totalorder %s55, %s71
      %p73 = scmp.eq.s32.totalorder %s21, 0
      %p74 = por %p72, %p73
      %s76 = sadd.s32 %s75, 1
      %p79 = scmp.eq.s32.totalorder %s15, 1
      %p80 = scmp.ne.s32.totalorder %s75, %s77
      %p81 = scmp.eq.s32.totalorder %s15, 0
      %p82 = por %p80, %p81
      %p83 = scmp.ne.s32.totalorder %s75, %s77
      %p84 = scmp.eq.s32.totalorder %s20, 1
      %p85 = por %p83, %p84
      %p86 = scmp.ne.s32.totalorder %s77, %s78
      %p87 = scmp.eq.s32.totalorder %s20, 0
      %p88 = por %p86, %p87
      %p89 = scmp.ne.s32.totalorder %s77, %s78
      %p90 = scmp.eq.s32.totalorder %s21, 1
      %p91 = por %p89, %p90
      %p93 = scmp.ne.s32.totalorder %s78, %s92
      %p94 = scmp.eq.s32.totalorder %s21, 0
      %p95 = por %p93, %p94
      %s97 = sadd.s32 %s96, 1
      %p100 = scmp.eq.s32.totalorder %s15, 1
      %p101 = scmp.ne.s32.totalorder %s96, %s98
      %p102 = scmp.eq.s32.totalorder %s15, 0
      %p103 = por %p101, %p102
      %p104 = scmp.ne.s32.totalorder %s96, %s98
      %p105 = scmp.eq.s32.totalorder %s20, 1
      %p106 = por %p104, %p105
      %p107 = scmp.ne.s32.totalorder %s98, %s99
      %p108 = scmp.eq.s32.totalorder %s20, 0
      %p109 = por %p107, %p108
      %p110 = scmp.ne.s32.totalorder %s98, %s99
      %p111 = scmp.eq.s32.totalorder %s21, 1
      %p112 = por %p110, %p111
      %p114 = scmp.ne.s32.totalorder %s99, %s113
      %p115 = scmp.eq.s32.totalorder %s21, 0
      %p116 = por %p114, %p115
      %s118 = sadd.s32 %s117, 1
      %p121 = scmp.eq.s32.totalorder %s15, 1
      %p122 = scmp.ne.s32.totalorder %s117, %s119
      %p123 = scmp.eq.s32.totalorder %s15, 0
      %p124 = por %p122, %p123
      %p125 = scmp.ne.s32.totalorder %s117, %s119
      %p126 = scmp.eq.s32.totalorder %s20, 1
      %p127 = por %p125, %p126
      %p128 = scmp.ne.s32.totalorder %s119, %s120
      %p129 = scmp.eq.s32.totalorder %s20, 0
      %p130 = por %p128, %p129
      %p131 = scmp.ne.s32.totalorder %s119, %s120
      %p132 = scmp.eq.s32.totalorder %s21, 1
      %p133 = por %p131, %p132
      %p135 = scmp.ne.s32.totalorder %s120, %s134
      %p136 = scmp.eq.s32.totalorder %s21, 0
      %p137 = por %p135, %p136
      %s138 = ssub.s32 %s15, %s22
      %p139 = scmp.eq.s32.totalorder %s138, 0
      %s141 = sadd.s32 %s140, 1
      %s142 = scalar_select %p139, %s140, %s141
      %p145 = pneg %p139
      %p146 = scmp.eq.s32.totalorder %s15, 1
      %p147 = por %p145, %p146
      %p148 = scmp.ne.s32.totalorder %s140, %s143
      %p149 = scmp.eq.s32.totalorder %s15, 0
      %p150 = por %p148, %p149
      %p151 = scmp.ne.s32.totalorder %s140, %s143
      %p152 = scmp.eq.s32.totalorder %s20, 1
      %p153 = por %p151, %p152
      %p154 = scmp.ne.s32.totalorder %s143, %s144
      %p155 = scmp.eq.s32.totalorder %s20, 0
      %p156 = por %p154, %p155
      %p157 = scmp.ne.s32.totalorder %s143, %s144
      %p158 = scmp.eq.s32.totalorder %s21, 1
      %p159 = por %p157, %p158
      %p161 = scmp.ne.s32.totalorder %s144, %s160
      %p162 = scmp.eq.s32.totalorder %s21, 0
      %p163 = por %p161, %p162
      %p164 = scmp.le.s32.totalorder 1, %s15
      %p165 = scmp.lt.s32.totalorder %s15, 3
      %p166 = pnand %p164, %p165
      %p167 = pneg %p166
      // Predicated region
      $region9: #{tpu_custom_call.1} parent=5 // pred_check
        _
      $region10: #{tpu_custom_call.1} parent=5 // pred_check_branch
        %169 = sbr.rel (%p166) target = $region12
      $region11: #{tpu_custom_call.1} parent=5 // pred_region
        %s170 = ssub.s32 %s15, 1
        // Predicated region
        $region13: #{tpu_custom_call.1} parent=11 // pred_check
          %p171 = pneg %p88
        $region14: #{tpu_custom_call.1} parent=11 // pred_check_branch
          %173 = sbr.rel (%p171) target = $region16
        $region15: #{tpu_custom_call.1} parent=11 // pred_region
          %s175 = ssub.s32 3072, 3072
          %176 = vsyncadd [#allocation3], %s175
          %s177 = sshll.u32 [#allocation2], 4
          %s178 = int_to_ptr.vmem [resolvable:$true] %s177
          %183 = dma.hbm_to_vmem [thread:$0]  %s2, 3072, %s178, [#allocation3], 64, 64, 4
        $region16: #{tpu_custom_call.1} parent=11 // pred_fallthru
          _
        // Predicated region
        $region17: #{tpu_custom_call.1} parent=11 // pred_check
          %p184 = pneg %p109
        $region18: #{tpu_custom_call.1} parent=11 // pred_check_branch
          %186 = sbr.rel (%p184) target = $region20
        $region19: #{tpu_custom_call.1} parent=11 // pred_region
          _
        $region20: #{tpu_custom_call.1} parent=11 // pred_fallthru
          _
        // Predicated region
        $region21: #{tpu_custom_call.1} parent=11 // pred_check
          %p187 = pneg %p130
        $region22: #{tpu_custom_call.1} parent=11 // pred_check_branch
          %189 = sbr.rel (%p187) target = $region24
        $region23: #{tpu_custom_call.1} parent=11 // pred_region
          _
        $region24: #{tpu_custom_call.1} parent=11 // pred_fallthru
          _
      $region12: #{tpu_custom_call.1} parent=5 // pred_fallthru
        _
      %p190 = scmp.lt.s32.totalorder %s15, 2
      // Predicated region
      $region25: #{tpu_custom_call.1} parent=5 // pred_check
        %p191 = pneg %p190
      $region26: #{tpu_custom_call.1} parent=5 // pred_check_branch
        %193 = sbr.rel (%p191) target = $region28
      $region27: #{tpu_custom_call.1} parent=5 // pred_region
        // Predicated region
        $region29: #{tpu_custom_call.1} parent=27 // pred_check
          %p194 = pneg %p35
        $region30: #{tpu_custom_call.1} parent=27 // pred_check_branch
          %196 = sbr.rel (%p194) target = $region32
        $region31: #{tpu_custom_call.1} parent=27 // pred_region
          %p197 = scmp.lt.s32.totalorder %s15, 1
          %s198 = scalar_select %p197, %s15, 1
          %s199 = smul.addr %s198, 4
          %s200 = scalar_lea.vmem %s0, %s199
        $region32: #{tpu_custom_call.1} parent=27 // pred_fallthru
          _
        // Predicated region
        $region33: #{tpu_custom_call.1} parent=27 // pred_check
          %p201 = pneg %p61
        $region34: #{tpu_custom_call.1} parent=27 // pred_check_branch
          %203 = sbr.rel (%p201) target = $region36
        $region35: #{tpu_custom_call.1} parent=27 // pred_region
          %p204 = scmp.lt.s32.totalorder %s15, 1
          %s205 = scalar_select %p204, %s15, 1
          %s206 = smul.addr %s205, 8
          %s207 = scalar_lea.vmem %s1, %s206
        $region36: #{tpu_custom_call.1} parent=27 // pred_fallthru
          _
      $region28: #{tpu_custom_call.1} parent=5 // pred_fallthru
        _
      %p208 = scmp.le.s32.totalorder 1, %s15
      %p209 = scmp.lt.s32.totalorder %s15, 3
      %p210 = pnand %p208, %p209
      %p211 = pneg %p210
      // Predicated region
      $region37: #{tpu_custom_call.1} parent=5 // pred_check
        _
      $region38: #{tpu_custom_call.1} parent=5 // pred_check_branch
        %213 = sbr.rel (%p210) target = $region40
      $region39: #{tpu_custom_call.1} parent=5 // pred_region
        %s214 = ssub.s32 %s15, 1
        // Predicated region
        $region41: #{tpu_custom_call.1} parent=39 // pred_check
          %p215 = pneg %p88
        $region42: #{tpu_custom_call.1} parent=39 // pred_check_branch
          %217 = sbr.rel (%p215) target = $region44
        $region43: #{tpu_custom_call.1} parent=39 // pred_region
          %218 = dma.done [#allocation3], 3072
        $region44: #{tpu_custom_call.1} parent=39 // pred_fallthru
          _
        %p219 = scmp.lt.s32.totalorder %s20, 1
        %s220 = scalar_select %p219, %s20, 1
        %s221 = smul.addr %s220, 4
        %s222 = scalar_lea.vmem %s0, %s221
        %p223 = pneg %p41
        %p224 = pneg %p38
        %p225 = scmp.lt.s32.totalorder %s20, 1
        %s226 = scalar_select %p225, %s20, 1
        %s227 = smul.addr %s226, 8
        %s228 = scalar_lea.vmem %s1, %s227
        %p229 = pneg %p67
        %p230 = pneg %p64
        %p231 = pneg %p88
        %p232 = pneg %p85
        %p233 = pneg %p109
        %p234 = pneg %p106
        %p235 = pneg %p130
        %p236 = pneg %p127
        %p237 = pneg %p156
        %p238 = pneg %p153
        %s239 = sand.u32 %s143, 1
        %s240 = scalar_lea.sflag [#allocation4], %s239
        %s241 = sand.u32 %s143, 1
        %s242 = smul.addr %s241, 8
        %s243 = scalar_lea.vmem [#allocation5], %s242
        %p244 = scmp.lt.s32.totalorder %s20, 1
        %s245 = scalar_select %p244, %s20, 1
        %s246 = smul.addr %s245, 4
        %s247 = scalar_lea.vmem %s0, %s246
        %p248 = scmp.lt.s32.totalorder %s20, 1
        %s249 = scalar_select %p248, %s20, 1
        %s250 = smul.addr %s249, 8
        %s251 = scalar_lea.vmem %s1, %s250
        %v253 = vld [vmem:[#allocation2] sm:$0xf]
        %v254 = vld [vmem:[#allocation2 + $0x4] sm:$0xf]
        %v255 = vld [vmem:[#allocation2 + $0x8] sm:$0xf]
        %v256 = vld [vmem:[#allocation2 + $0xc] sm:$0xf]
        %v257 = vld [vmem:[#allocation2 + $0x10] sm:$0xf]
        %v258 = vld [vmem:[#allocation2 + $0x14] sm:$0xf]
        %v259 = vld [vmem:[#allocation2 + $0x18] sm:$0xf]
        %v260 = vld [vmem:[#allocation2 + $0x1c] sm:$0xf]
        %v261 = vld [vmem:[#allocation2 + $0x20] sm:$0xf]
        %v262 = vld [vmem:[#allocation2 + $0x24] sm:$0xf]
        %v263 = vld [vmem:[#allocation2 + $0x28] sm:$0xf]
        %v264 = vld [vmem:[#allocation2 + $0x2c] sm:$0xf]
        %v265 = vld [vmem:[#allocation2 + $0x30] sm:$0xf]
        %v266 = vld [vmem:[#allocation2 + $0x34] sm:$0xf]
        %v267 = vld [vmem:[#allocation2 + $0x38] sm:$0xf]
        %v268 = vld [vmem:[#allocation2 + $0x3c] sm:$0xf]
        %s269 = scalar_lea.vmem [#allocation2], 64
        %v270 = vld [vmem:[%s269] sm:$0xf]
        %v271 = vld [vmem:[%s269 + $0x4] sm:$0xf]
        %v272 = vld [vmem:[%s269 + $0x8] sm:$0xf]
        %v273 = vld [vmem:[%s269 + $0xc] sm:$0xf]
        %v274 = vld [vmem:[%s269 + $0x10] sm:$0xf]
        %v275 = vld [vmem:[%s269 + $0x14] sm:$0xf]
        %v276 = vld [vmem:[%s269 + $0x18] sm:$0xf]
        %v277 = vld [vmem:[%s269 + $0x1c] sm:$0xf]
        %v278 = vld [vmem:[%s269 + $0x20] sm:$0xf]
        %v279 = vld [vmem:[%s269 + $0x24] sm:$0xf]
        %v280 = vld [vmem:[%s269 + $0x28] sm:$0xf]
        %v281 = vld [vmem:[%s269 + $0x2c] sm:$0xf]
        %v282 = vld [vmem:[%s269 + $0x30] sm:$0xf]
        %v283 = vld [vmem:[%s269 + $0x34] sm:$0xf]
        %v284 = vld [vmem:[%s269 + $0x38] sm:$0xf]
        %v285 = vld [vmem:[%s269 + $0x3c] sm:$0xf]
        %s286 = scalar_lea.vmem [#allocation2], 128
        %v287 = vld [vmem:[%s286] sm:$0xf]
        %v288 = vld [vmem:[%s286 + $0x4] sm:$0xf]
        %v289 = vld [vmem:[%s286 + $0x8] sm:$0xf]
        %v290 = vld [vmem:[%s286 + $0xc] sm:$0xf]
        %v291 = vld [vmem:[%s286 + $0x10] sm:$0xf]
        %v292 = vld [vmem:[%s286 + $0x14] sm:$0xf]
        %v293 = vld [vmem:[%s286 + $0x18] sm:$0xf]
        %v294 = vld [vmem:[%s286 + $0x1c] sm:$0xf]
        %v295 = vld [vmem:[%s286 + $0x20] sm:$0xf]
        %v296 = vld [vmem:[%s286 + $0x24] sm:$0xf]
        %v297 = vld [vmem:[%s286 + $0x28] sm:$0xf]
        %v298 = vld [vmem:[%s286 + $0x2c] sm:$0xf]
        %v299 = vld [vmem:[%s286 + $0x30] sm:$0xf]
        %v300 = vld [vmem:[%s286 + $0x34] sm:$0xf]
        %v301 = vld [vmem:[%s286 + $0x38] sm:$0xf]
        %v302 = vld [vmem:[%s286 + $0x3c] sm:$0xf]
        %v303 = vld [vmem:[%s4] sm:$0x1]
        %v304 = vld [vmem:[%s4 + $0x1] sm:$0x1]
        %v305 = vld [vmem:[%s4 + $0x2] sm:$0x1]
        %v306 = vld [vmem:[%s3] sm:$0x1]
        %v307 = vld [vmem:[%s247] sm:$0xf]
        %v308 = vld [vmem:[%s251] sm:$0xff]
        %310 = vset.pattern.permute.xlu0 0
        %311 = vperm.xlu0 %310, %v308
        %v312 = vpop.permute.xlu0 %311
        %v315 = vlaneseq
        %v316 = vshrl.u32 %v315, 7
        %v317 = vsub.s32 0, %v316
        %v318 = vrot.slane %v306, %v317
        %v320 = vmul.f32 %v312, %v318
        %v337 = vunpack.c.l.b16 %v253
        %v338 = vunpack.c.l.b16 %v254
        %v339 = vunpack.c.l.b16 %v255
        %v340 = vunpack.c.l.b16 %v256
        %v341 = vunpack.c.l.b16 %v257
        %v342 = vunpack.c.l.b16 %v258
        %v343 = vunpack.c.l.b16 %v259
        %v344 = vunpack.c.l.b16 %v260
        %v345 = vunpack.c.l.b16 %v261
        %v346 = vunpack.c.l.b16 %v262
        %v347 = vunpack.c.l.b16 %v263
        %v348 = vunpack.c.l.b16 %v264
        %v349 = vunpack.c.l.b16 %v265
        %v350 = vunpack.c.l.b16 %v266
        %v351 = vunpack.c.l.b16 %v267
        %v352 = vunpack.c.l.b16 %v268
        %v353 = vpack.c.b16 %v338, %v337
        %v354 = vpack.c.b16 %v340, %v339
        %v355 = vpack.c.b16 %v342, %v341
        %v356 = vpack.c.b16 %v344, %v343
        %v357 = vpack.c.b16 %v346, %v345
        %v358 = vpack.c.b16 %v348, %v347
        %v359 = vpack.c.b16 %v350, %v349
        %v360 = vpack.c.b16 %v352, %v351
        %369 = vmatprep.subr.bf16.mxu0 0
        %370 = vmatpush1.bf16.msra.mxu0 %v360
        %371 = vmatprep.subr.bf16.mxu0 0
        %372 = vmatpush1.bf16.msra.mxu0 %v359
        %373 = vmatprep.subr.bf16.mxu0 0
        %374 = vmatpush1.bf16.msra.mxu0 %v358
        %375 = vmatprep.subr.bf16.mxu0 0
        %376 = vmatpush1.bf16.msra.mxu0 %v357
        %377 = vmatprep.subr.bf16.mxu0 0
        %378 = vmatpush1.bf16.msra.mxu0 %v356
        %379 = vmatprep.subr.bf16.mxu0 0
        %380 = vmatpush1.bf16.msra.mxu0 %v355
        %381 = vmatprep.subr.bf16.mxu0 0
        %382 = vmatpush1.bf16.msra.mxu0 %v354
        %383 = vmatprep.subr.bf16.mxu0 0
        %384 = vmatpush1.bf16.msra.mxu0 %v353
        %385 = vmatprep.subr.bf16.mxu0 0
        %386 = vmatpush2.bf16.msra.mxu0 0
        %387 = vmatprep.subr.bf16.mxu0 0
        %388 = vmatpush2.bf16.msra.mxu0 0
        %389 = vmatprep.subr.bf16.mxu0 0
        %390 = vmatpush2.bf16.msra.mxu0 0
        %391 = vmatprep.subr.bf16.mxu0 0
        %392 = vmatpush2.bf16.msra.mxu0 0
        %393 = vmatprep.subr.bf16.mxu0 0
        %394 = vmatpush2.bf16.msra.mxu0 0
        %395 = vmatprep.subr.bf16.mxu0 0
        %396 = vmatpush2.bf16.msra.mxu0 0
        %397 = vmatprep.subr.bf16.mxu0 0
        %398 = vmatpush2.bf16.msra.mxu0 0
        %399 = vmatprep.subr.bf16.mxu0 0
        %400 = vmatpush2.bf16.msra.mxu0 0
        %401 = vmatprep.mubr.bf16.mxu0 0
        %402 = vmatmul.mubr.bf16.gmra.mxu0 %v307
        %v403 = vpop.f32.mrf.mxu0
        %v404 = vadd.f32 %v320, %v403
        %v405 = vpop.f32.mrf.mxu0
        %v406 = vpop.f32.mrf.mxu0
        %v407 = vpop.f32.mrf.mxu0
        %408 = vdwg.mxu0
        %v409 = vlaneseq
        %v410 = vshrl.u32 %v409, 7
        %v411 = vsub.s32 0, %v410
        %v412 = vrot.slane %v303, %v411
        %v413 = vadd.f32 %v404, %v412
        %v414 = vmax.f32 %v413, 0.0
        %v415 = vpack.c.bf16 %v414, %v414
        %v416 = vlaneseq
        %v417 = vshrl.u32 %v416, 7
        %v418 = vsub.s32 0, %v417
        %v419 = vrot.slane %v304, %v418
        %v436 = vunpack.c.l.b16 %v270
        %v437 = vunpack.c.l.b16 %v271
        %v438 = vunpack.c.l.b16 %v272
        %v439 = vunpack.c.l.b16 %v273
        %v440 = vunpack.c.l.b16 %v274
        %v441 = vunpack.c.l.b16 %v275
        %v442 = vunpack.c.l.b16 %v276
        %v443 = vunpack.c.l.b16 %v277
        %v444 = vunpack.c.l.b16 %v278
        %v445 = vunpack.c.l.b16 %v279
        %v446 = vunpack.c.l.b16 %v280
        %v447 = vunpack.c.l.b16 %v281
        %v448 = vunpack.c.l.b16 %v282
        %v449 = vunpack.c.l.b16 %v283
        %v450 = vunpack.c.l.b16 %v284
        %v451 = vunpack.c.l.b16 %v285
        %v452 = vpack.c.b16 %v437, %v436
        %v453 = vpack.c.b16 %v439, %v438
        %v454 = vpack.c.b16 %v441, %v440
        %v455 = vpack.c.b16 %v443, %v442
        %v456 = vpack.c.b16 %v445, %v444
        %v457 = vpack.c.b16 %v447, %v446
        %v458 = vpack.c.b16 %v449, %v448
        %v459 = vpack.c.b16 %v451, %v450
        %468 = vmatprep.subr.bf16.mxu0 0
        %469 = vmatpush1.bf16.msra.mxu0 %v459
        %470 = vmatprep.subr.bf16.mxu0 0
        %471 = vmatpush1.bf16.msra.mxu0 %v458
        %472 = vmatprep.subr.bf16.mxu0 0
        %473 = vmatpush1.bf16.msra.mxu0 %v457
        %474 = vmatprep.subr.bf16.mxu0 0
        %475 = vmatpush1.bf16.msra.mxu0 %v456
        %476 = vmatprep.subr.bf16.mxu0 0
        %477 = vmatpush1.bf16.msra.mxu0 %v455
        %478 = vmatprep.subr.bf16.mxu0 0
        %479 = vmatpush1.bf16.msra.mxu0 %v454
        %480 = vmatprep.subr.bf16.mxu0 0
        %481 = vmatpush1.bf16.msra.mxu0 %v453
        %482 = vmatprep.subr.bf16.mxu0 0
        %483 = vmatpush1.bf16.msra.mxu0 %v452
        %484 = vmatprep.subr.bf16.mxu0 0
        %485 = vmatpush2.bf16.msra.mxu0 0
        %486 = vmatprep.subr.bf16.mxu0 0
        %487 = vmatpush2.bf16.msra.mxu0 0
        %488 = vmatprep.subr.bf16.mxu0 0
        %489 = vmatpush2.bf16.msra.mxu0 0
        %490 = vmatprep.subr.bf16.mxu0 0
        %491 = vmatpush2.bf16.msra.mxu0 0
        %492 = vmatprep.subr.bf16.mxu0 0
        %493 = vmatpush2.bf16.msra.mxu0 0
        %494 = vmatprep.subr.bf16.mxu0 0
        %495 = vmatpush2.bf16.msra.mxu0 0
        %496 = vmatprep.subr.bf16.mxu0 0
        %497 = vmatpush2.bf16.msra.mxu0 0
        %498 = vmatprep.subr.bf16.mxu0 0
        %499 = vmatpush2.bf16.msra.mxu0 0
        %500 = vmatprep.mubr.bf16.mxu0 0
        %501 = vmatmul.mubr.bf16.gmra.mxu0 %v415
        %v502 = vpop.f32.mrf.mxu0
        %v503 = vadd.f32 %v419, %v502
        %v504 = vpop.f32.mrf.mxu0
        %v505 = vpop.f32.mrf.mxu0
        %v506 = vpop.f32.mrf.mxu0
        %507 = vdwg.mxu0
        %v508 = vmax.f32 %v503, 0.0
        %v509 = vpack.c.bf16 %v508, %v508
        %v510 = vlaneseq
        %v511 = vshrl.u32 %v510, 7
        %v512 = vsub.s32 0, %v511
        %v513 = vrot.slane %v305, %v512
        %v530 = vunpack.c.l.b16 %v287
        %v531 = vunpack.c.l.b16 %v288
        %v532 = vunpack.c.l.b16 %v289
        %v533 = vunpack.c.l.b16 %v290
        %v534 = vunpack.c.l.b16 %v291
        %v535 = vunpack.c.l.b16 %v292
        %v536 = vunpack.c.l.b16 %v293
        %v537 = vunpack.c.l.b16 %v294
        %v538 = vunpack.c.l.b16 %v295
        %v539 = vunpack.c.l.b16 %v296
        %v540 = vunpack.c.l.b16 %v297
        %v541 = vunpack.c.l.b16 %v298
        %v542 = vunpack.c.l.b16 %v299
        %v543 = vunpack.c.l.b16 %v300
        %v544 = vunpack.c.l.b16 %v301
        %v545 = vunpack.c.l.b16 %v302
        %v546 = vpack.c.b16 %v531, %v530
        %v547 = vpack.c.b16 %v533, %v532
        %v548 = vpack.c.b16 %v535, %v534
        %v549 = vpack.c.b16 %v537, %v536
        %v550 = vpack.c.b16 %v539, %v538
        %v551 = vpack.c.b16 %v541, %v540
        %v552 = vpack.c.b16 %v543, %v542
        %v553 = vpack.c.b16 %v545, %v544
        %562 = vmatprep.subr.bf16.mxu0 0
        %563 = vmatpush1.bf16.msra.mxu0 %v553
        %564 = vmatprep.subr.bf16.mxu0 0
        %565 = vmatpush1.bf16.msra.mxu0 %v552
        %566 = vmatprep.subr.bf16.mxu0 0
        %567 = vmatpush1.bf16.msra.mxu0 %v551
        %568 = vmatprep.subr.bf16.mxu0 0
        %569 = vmatpush1.bf16.msra.mxu0 %v550
        %570 = vmatprep.subr.bf16.mxu0 0
        %571 = vmatpush1.bf16.msra.mxu0 %v549
        %572 = vmatprep.subr.bf16.mxu0 0
        %573 = vmatpush1.bf16.msra.mxu0 %v548
        %574 = vmatprep.subr.bf16.mxu0 0
        %575 = vmatpush1.bf16.msra.mxu0 %v547
        %576 = vmatprep.subr.bf16.mxu0 0
        %577 = vmatpush1.bf16.msra.mxu0 %v546
        %578 = vmatprep.subr.bf16.mxu0 0
        %579 = vmatpush2.bf16.msra.mxu0 0
        %580 = vmatprep.subr.bf16.mxu0 0
        %581 = vmatpush2.bf16.msra.mxu0 0
        %582 = vmatprep.subr.bf16.mxu0 0
        %583 = vmatpush2.bf16.msra.mxu0 0
        %584 = vmatprep.subr.bf16.mxu0 0
        %585 = vmatpush2.bf16.msra.mxu0 0
        %586 = vmatprep.subr.bf16.mxu0 0
        %587 = vmatpush2.bf16.msra.mxu0 0
        %588 = vmatprep.subr.bf16.mxu0 0
        %589 = vmatpush2.bf16.msra.mxu0 0
        %590 = vmatprep.subr.bf16.mxu0 0
        %591 = vmatpush2.bf16.msra.mxu0 0
        %592 = vmatprep.subr.bf16.mxu0 0
        %593 = vmatpush2.bf16.msra.mxu0 0
        %594 = vmatprep.mubr.bf16.mxu0 0
        %595 = vmatmul.mubr.bf16.gmra.mxu0 %v509
        %v596 = vpop.f32.mrf.mxu0
        %v597 = vadd.f32 %v513, %v596
        %v598 = vpop.f32.mrf.mxu0
        %v599 = vpop.f32.mrf.mxu0
        %v600 = vpop.f32.mrf.mxu0
        %601 = vdwg.mxu0
        %vm602 = vcmask 523264
        %603 = vst.msk [vmem:[%s243] sm:$0xff] %vm602, %v597
        %s604 = sand.u32 %s143, 1
        %s605 = scalar_lea.sflag [#allocation4], %s604
        %s606 = sand.u32 %s143, 1
        %s607 = smul.addr %s606, 8
        %s608 = scalar_lea.vmem [#allocation5], %s607
        // Predicated region
        $region45: #{tpu_custom_call.1} parent=39 // pred_check
          %p609 = pneg %p153
        $region46: #{tpu_custom_call.1} parent=39 // pred_check_branch
          %611 = sbr.rel (%p609) target = $region48
        $region47: #{tpu_custom_call.1} parent=39 // pred_region
          %s613 = ssub.s32 128, 128
          %614 = vsyncadd %s605, %s613
          %s615 = smul.addr %s20, 128
          %s616 = scalar_lea.hbm %s5, %s615
          %s618 = sshll.u32 %s608, 4
          %s619 = int_to_ptr.vmem [resolvable:$true] %s618
          %621 = dma.vmem_to_hbm [thread:$0]  %s619, 128, %s616, %s605
        $region48: #{tpu_custom_call.1} parent=39 // pred_fallthru
          _
      $region40: #{tpu_custom_call.1} parent=5 // pred_fallthru
        _
      %p622 = scmp.le.s32.totalorder 2, %s15
      // Predicated region
      $region49: #{tpu_custom_call.1} parent=5 // pred_check
        %p623 = pneg %p622
      $region50: #{tpu_custom_call.1} parent=5 // pred_check_branch
        %625 = sbr.rel (%p623) target = $region52
      $region51: #{tpu_custom_call.1} parent=5 // pred_region
        %s626 = ssub.s32 %s15, 2
        // Predicated region
        $region53: #{tpu_custom_call.1} parent=51 // pred_check
          %p627 = pneg %p159
        $region54: #{tpu_custom_call.1} parent=51 // pred_check_branch
          %629 = sbr.rel (%p627) target = $region56
        $region55: #{tpu_custom_call.1} parent=51 // pred_region
          %s630 = sand.u32 %s144, 1
          %s631 = scalar_lea.sflag [#allocation4], %s630
          %s632 = sand.u32 %s144, 1
          %s633 = smul.addr %s632, 8
          %s634 = scalar_lea.vmem [#allocation5], %s633
          %635 = dma.done %s631, 128
        $region56: #{tpu_custom_call.1} parent=51 // pred_fallthru
          _
      $region52: #{tpu_custom_call.1} parent=5 // pred_fallthru
        _
    $region6: #{tpu_custom_call.1} parent=1 // loop_footer
      %s19 = sadd.s32 1, %s15
    $region7: #{tpu_custom_call.1} parent=1 // loop_footer_branch
      %14 = sbr.rel target = $region3
    $region8: #{tpu_custom_call.1} parent=1 // loop_exit
      _
    %636 = vsyncpa [#allocation3], 1
    %s637 = scalar_lea.sflag [#allocation3], 1
    %638 = vsyncpa %s637, 1
    %639 = vsyncpa [#allocation4], 1
    %s640 = scalar_lea.sflag [#allocation4], 1
    %641 = vsyncpa %s640, 1

</llo_original>
